<compile_context>
chip_gen: v7x
topology: tpu7x:2x2x1
jax: 0.10.0
libtpu: 0.0.40
codegen_flags: <defaults>
</compile_context>

<pallas_src>
import jax
import jax.numpy as jnp
from jax import lax
from jax.experimental import pallas as pl
from jax.experimental.pallas import tpu as pltpu

EPS = 1e-12
_INV_SQRT2 = 0.7071067811865476


def _projection_head_kernel(x_ref, w1_ref, w2_ref, params_ref, o_ref):
    # Cast the x tile to the MXU dtype in-kernel (cheap VALU op, hidden under
    # the MXU/HBM bottleneck) instead of materializing a bf16 copy in HBM.
    x = x_ref[...].astype(w1_ref.dtype)

    # ---- Linear 1 (MXU, f32 accumulation) ----
    proj = jnp.dot(x, w1_ref[...], preferred_element_type=jnp.float32)

    params = params_ref[...]                 # (4, P) f32 rows: b1, b2, gamma, beta
    proj = proj + params[0]

    # Skip connection taken right after the projection.
    skip = proj

    # ---- exact erf-GELU (matches torch.nn.GELU default) ----
    h = 0.5 * proj * (1.0 + lax.erf(proj * jnp.float32(_INV_SQRT2)))

    # ---- Dropout: identity at inference time ----
    # TODO(synk): training-mode dropout (p=0.1) would need pltpu.prng_random_bits.

    # ---- Linear 2 (MXU) + bias + skip ----
    out = jnp.dot(h.astype(w2_ref.dtype), w2_ref[...],
                  preferred_element_type=jnp.float32)
    out = out + params[1] + skip

    # ---- LayerNorm over last dim (two-pass, biased variance, eps=1e-12) ----
    mean = jnp.mean(out, axis=-1, keepdims=True)
    centered = out - mean
    var = jnp.mean(centered * centered, axis=-1, keepdims=True)
    normed = centered * lax.rsqrt(var + jnp.float32(EPS))
    o_ref[...] = (params[2] * normed + params[3]).astype(o_ref.dtype)


def projection_head(x, w1, b1, w2, b2, gamma, beta, *,
                    compute_dtype=jnp.bfloat16, out_dtype=None):
    """x: [B, E]; w1: [E, P]; b1: [P]; w2: [P, P]; b2: [P]; gamma/beta: [P].

    Weights are cast once to `compute_dtype` (bf16) for the MXU; x is cast
    inside the kernel. All accumulation / GELU / LayerNorm math is f32.
    Output dtype defaults to `compute_dtype` to halve writeback bytes.
    """
    B, E = x.shape
    E_w, P = w1.shape
    assert E_w == E and w2.shape == (P, P)
    out_dtype = out_dtype or compute_dtype

    # Weights cast once (small, one-time). Small 1-D params packed into one
    # (4, P) f32 block so they cost one DMA descriptor and one sublane group.
    w1c = w1.astype(compute_dtype)
    w2c = w2.astype(compute_dtype)
    params = jnp.stack([b1, b2, gamma, beta]).astype(jnp.float32)   # (4, P)

    # ---- generation-aware VMEM budget ----
    try:
        vmem_cap = int(pltpu.get_tpu_info().vmem_capacity_bytes)
    except Exception:
        vmem_cap = 64 << 20                      # conservative (v7x per-core)
    big_vmem = vmem_cap >= (96 << 20)            # v5e/v6e 128 MiB parts

    # ---- batch tile: full batch when small; bigger tiles on 128 MiB parts.
    # When tiling, keep >= 8 grid steps so megacore sharding (v7x) still gives
    # each TensorCore enough steps to overlap DMA with compute.
    if B <= 256:
        TM = B                                   # full-dim block (always legal)
    else:
        TM = 512 if big_vmem else 256
        while TM > 128 and pl.cdiv(B, TM) < 8:
            TM //= 2
    grid = (pl.cdiv(B, TM),)

    x_it = jnp.dtype(x.dtype).itemsize
    c_it = jnp.dtype(compute_dtype).itemsize
    o_it = jnp.dtype(out_dtype).itemsize

    cost = pl.CostEstimate(
        flops=2 * B * P * (E + P),
        transcendentals=B * P,                   # erf per hidden activation
        bytes_accessed=(B * E * x_it + (E * P + P * P) * c_it
                        + 4 * P * 4 + B * P * o_it),
    )

    def call(single_buffer_params):
        wbuf = 1 if single_buffer_params else 2
        blk_bytes = (
            2 * TM * E * x_it                    # x tile (double-buffered)
            + 2 * TM * P * o_it                  # out tile (double-buffered)
            + wbuf * (E * P + P * P) * c_it      # resident weights
            + wbuf * 8 * P * 4                   # packed params ((4,P) -> 8 sublanes)
            + TM * P * (4 + 4 + 4 + 2)           # proj/skip, out, normed (f32) + h (bf16)
            + TM * E * c_it                      # in-kernel bf16 cast of the x tile
        )
        vmem_limit = int(min(max(blk_bytes * 5 // 4 + (2 << 20), 8 << 20),
                             (vmem_cap * 7) // 10))

        def resident(shape):
            # Constant index_map => block is fetched once; single-buffer it so a
            # second never-used copy of every weight isn't allocated in VMEM.
            if single_buffer_params:
                return pl.BlockSpec(shape, lambda i: (0, 0),
                                    pipeline_mode=pl.Buffered(1))
            return pl.BlockSpec(shape, lambda i: (0, 0))

        return pl.pallas_call(
            _projection_head_kernel,
            out_shape=jax.ShapeDtypeStruct((B, P), out_dtype),
            grid=grid,
            in_specs=[
                pl.BlockSpec((TM, E), lambda i: (i, 0)),   # x: tiled over batch
                resident((E, P)),                          # w1: VMEM-resident
                resident((P, P)),                          # w2: VMEM-resident
                resident((4, P)),                          # b1/b2/gamma/beta packed
            ],
            out_specs=pl.BlockSpec((TM, P), lambda i: (i, 0)),
            compiler_params=pltpu.CompilerParams(
                dimension_semantics=("parallel",),         # megacore sharding on v7x
                vmem_limit_bytes=vmem_limit,
            ),
            cost_estimate=cost,
        )(x, w1c, w2c, params)

    try:
        return call(True)      # single-buffered constant parameter blocks
    except Exception:
        return call(False)     # safe fallback: default double buffering


def reference(x, w1, b1, w2, b2, gamma, beta, compute_dtype=jnp.bfloat16):
    """Pure-JAX reference with the same bf16 matmul operands / f32 accumulation."""
    xc = x.astype(compute_dtype)
    proj = jnp.dot(xc, w1.astype(compute_dtype),
                   preferred_element_type=jnp.float32) + b1
    h = jax.nn.gelu(proj, approximate=False)
    out = jnp.dot(h.astype(compute_dtype), w2.astype(compute_dtype),
                  preferred_element_type=jnp.float32) + b2 + proj
    mean = out.mean(-1, keepdims=True)
    var = ((out - mean) ** 2).mean(-1, keepdims=True)
    return gamma * ((out - mean) / jnp.sqrt(var + EPS)) + beta


if __name__ == "__main__":
    # small shapes consistent with the module: batch=8, embedding_dim=64, projection_dim=128
    B, E, P = 8, 64, 128

    key = jax.random.PRNGKey(0)
    kx, k1, kb1, k2, kb2 = jax.random.split(key, 5)

    x = jax.random.normal(kx, (B, E), dtype=jnp.float32)

    # deterministic synthetic parameters (PyTorch Linear stores [out, in]; we keep [in, out])
    w1 = jax.random.normal(k1, (E, P), dtype=jnp.float32) * (1.0 / (E ** 0.5))
    b1 = jax.random.normal(kb1, (P,), dtype=jnp.float32) * 0.02
    w2 = jax.random.normal(k2, (P, P), dtype=jnp.float32) * (1.0 / (P ** 0.5))
    b2 = jax.random.normal(kb2, (P,), dtype=jnp.float32) * 0.02
    gamma = jnp.ones((P,), dtype=jnp.float32)
    beta = jnp.zeros((P,), dtype=jnp.float32)

    out = projection_head(x, w1, b1, w2, b2, gamma, beta)
    out = jax.block_until_ready(out)
    assert out.shape == (B, P)

    ref = reference(x, w1, b1, w2, b2, gamma, beta)
    out_f32 = out.astype(jnp.float32)
    err = float(jnp.max(jnp.abs(out_f32 - ref)))
    # bf16 output quantization on O(1) layernormed values -> ~1e-2 scale tolerance.
    assert jnp.allclose(out_f32, ref, atol=3e-2, rtol=3e-2), err

    print("KERNEL_OK")
</pallas_src>

<mosaic_0001>
module attributes {stable_mosaic.version = 11 : i64} {
  func.func @_projection_head_kernel(%arg0: i32, %arg1: memref<8x64xf32, #tpu.memory_space<vmem>>, %arg2: memref<64x128xbf16, #tpu.memory_space<vmem>>, %arg3: memref<128x128xbf16, #tpu.memory_space<vmem>>, %arg4: memref<4x128xf32, #tpu.memory_space<vmem>>, %arg5: memref<8x128xbf16, #tpu.memory_space<vmem>>) attributes {dimension_semantics = [#tpu.dimension_semantics<parallel>], iteration_bounds = array<i64: 1>, scalar_prefetch = 0 : i64, scratch_operands = 0 : i64, tpu.core_type = #tpu.core_type<tc>, window_params = [{transform_indices = @transform_0, window_bounds = array<i64: 8, 64>}, {pipeline_mode = #tpu.pipeline_mode<synchronous>, transform_indices = @transform_1, window_bounds = array<i64: 64, 128>}, {pipeline_mode = #tpu.pipeline_mode<synchronous>, transform_indices = @transform_2, window_bounds = array<i64: 128, 128>}, {pipeline_mode = #tpu.pipeline_mode<synchronous>, transform_indices = @transform_3, window_bounds = array<i64: 4, 128>}, {transform_indices = @transform_4, window_bounds = array<i64: 8, 128>}]} {
    %c0 = arith.constant 0 : index
    %c0_0 = arith.constant 0 : index
    %0 = vector.load %arg1[%c0, %c0_0] : memref<8x64xf32, #tpu.memory_space<vmem>>, vector<8x64xf32>
    %1 = arith.truncf %0 : vector<8x64xf32> to vector<8x64xbf16>
    %c0_1 = arith.constant 0 : index
    %c0_2 = arith.constant 0 : index
    %2 = vector.load %arg2[%c0_1, %c0_2] : memref<64x128xbf16, #tpu.memory_space<vmem>>, vector<64x128xbf16>
    %cst = arith.constant dense<0.000000e+00> : vector<8x128xf32>
    %3 = tpu.matmul %1, %2, %cst {dimension_numbers = #tpu.dot_dimension_numbers<[1], [0], [0], [1], [0, 0, 1, 1], [], []>} : vector<8x64xbf16>, vector<64x128xbf16>, vector<8x128xf32> -> vector<8x128xf32>
    %c0_3 = arith.constant 0 : index
    %c0_4 = arith.constant 0 : index
    %4 = vector.load %arg4[%c0_3, %c0_4] : memref<4x128xf32, #tpu.memory_space<vmem>>, vector<4x128xf32>
    %5 = vector.extract_strided_slice %4 {offsets = [0, 0], sizes = [1, 128], strides = [1, 1]} : vector<4x128xf32> to vector<1x128xf32>
    %6 = vector.shape_cast %5 : vector<1x128xf32> to vector<128xf32>
    %7 = vector.shape_cast %6 : vector<128xf32> to vector<1x128xf32>
    %8 = vector.broadcast %7 : vector<1x128xf32> to vector<8x128xf32>
    %9 = arith.addf %3, %8 : vector<8x128xf32>
    %cst_5 = arith.constant 5.000000e-01 : f32
    %10 = vector.broadcast %cst_5 : f32 to vector<8x128xf32>
    %11 = arith.mulf %10, %9 : vector<8x128xf32>
    %cst_6 = arith.constant 0.707106769 : f32
    %12 = vector.broadcast %cst_6 : f32 to vector<8x128xf32>
    %13 = arith.mulf %9, %12 : vector<8x128xf32>
    %14 = math.erf %13 : vector<8x128xf32>
    %cst_7 = arith.constant 1.000000e+00 : f32
    %15 = vector.broadcast %cst_7 : f32 to vector<8x128xf32>
    %16 = arith.addf %15, %14 : vector<8x128xf32>
    %17 = arith.mulf %11, %16 : vector<8x128xf32>
    %18 = arith.truncf %17 : vector<8x128xf32> to vector<8x128xbf16>
    %c0_8 = arith.constant 0 : index
    %c0_9 = arith.constant 0 : index
    %19 = vector.load %arg3[%c0_8, %c0_9] : memref<128x128xbf16, #tpu.memory_space<vmem>>, vector<128x128xbf16>
    %cst_10 = arith.constant dense<0.000000e+00> : vector<8x128xf32>
    %20 = tpu.matmul %18, %19, %cst_10 {dimension_numbers = #tpu.dot_dimension_numbers<[1], [0], [0], [1], [0, 0, 1, 1], [], []>} : vector<8x128xbf16>, vector<128x128xbf16>, vector<8x128xf32> -> vector<8x128xf32>
    %21 = vector.extract_strided_slice %4 {offsets = [1, 0], sizes = [1, 128], strides = [1, 1]} : vector<4x128xf32> to vector<1x128xf32>
    %22 = vector.shape_cast %21 : vector<1x128xf32> to vector<128xf32>
    %23 = vector.shape_cast %22 : vector<128xf32> to vector<1x128xf32>
    %24 = vector.broadcast %23 : vector<1x128xf32> to vector<8x128xf32>
    %25 = arith.addf %20, %24 : vector<8x128xf32>
    %26 = arith.addf %25, %9 : vector<8x128xf32>
    %cst_11 = arith.constant dense<0.000000e+00> : vector<8xf32>
    %27 = vector.multi_reduction <add>, %26, %cst_11 [1] : vector<8x128xf32> to vector<8xf32>
    %28 = vector.shape_cast %27 : vector<8xf32> to vector<8x1xf32>
    %cst_12 = arith.constant 1.280000e+02 : f32
    %29 = vector.broadcast %cst_12 : f32 to vector<8x1xf32>
    %30 = arith.divf %28, %29 : vector<8x1xf32>
    %31 = vector.broadcast %30 : vector<8x1xf32> to vector<8x128xf32>
    %32 = arith.subf %26, %31 : vector<8x128xf32>
    %33 = arith.mulf %32, %32 : vector<8x128xf32>
    %cst_13 = arith.constant dense<0.000000e+00> : vector<8xf32>
    %34 = vector.multi_reduction <add>, %33, %cst_13 [1] : vector<8x128xf32> to vector<8xf32>
    %35 = vector.shape_cast %34 : vector<8xf32> to vector<8x1xf32>
    %cst_14 = arith.constant 1.280000e+02 : f32
    %36 = vector.broadcast %cst_14 : f32 to vector<8x1xf32>
    %37 = arith.divf %35, %36 : vector<8x1xf32>
    %cst_15 = arith.constant 9.99999996E-13 : f32
    %38 = vector.broadcast %cst_15 : f32 to vector<8x1xf32>
    %39 = arith.addf %37, %38 : vector<8x1xf32>
    %40 = math.rsqrt %39 : vector<8x1xf32>
    %41 = vector.broadcast %40 : vector<8x1xf32> to vector<8x128xf32>
    %42 = arith.mulf %32, %41 : vector<8x128xf32>
    %43 = vector.extract_strided_slice %4 {offsets = [2, 0], sizes = [1, 128], strides = [1, 1]} : vector<4x128xf32> to vector<1x128xf32>
    %44 = vector.shape_cast %43 : vector<1x128xf32> to vector<128xf32>
    %45 = vector.shape_cast %44 : vector<128xf32> to vector<1x128xf32>
    %46 = vector.broadcast %45 : vector<1x128xf32> to vector<8x128xf32>
    %47 = arith.mulf %46, %42 : vector<8x128xf32>
    %48 = vector.extract_strided_slice %4 {offsets = [3, 0], sizes = [1, 128], strides = [1, 1]} : vector<4x128xf32> to vector<1x128xf32>
    %49 = vector.shape_cast %48 : vector<1x128xf32> to vector<128xf32>
    %50 = vector.shape_cast %49 : vector<128xf32> to vector<1x128xf32>
    %51 = vector.broadcast %50 : vector<1x128xf32> to vector<8x128xf32>
    %52 = arith.addf %47, %51 : vector<8x128xf32>
    %53 = arith.truncf %52 : vector<8x128xf32> to vector<8x128xbf16>
    %c0_16 = arith.constant 0 : index
    %c0_17 = arith.constant 0 : index
    %54 = vector.load %arg5[%c0_16, %c0_17] : memref<8x128xbf16, #tpu.memory_space<vmem>>, vector<8x128xbf16>
    tpu.vector_store %arg5[%c0_16, %c0_17], %53 {strides = array<i32>} : memref<8x128xbf16, #tpu.memory_space<vmem>>, vector<8x128xbf16>,
    return
  }
  func.func @transform_0(%arg0: i32) -> (i32, i32) {
    %c0_i32 = arith.constant 0 : i32
    %c0_i32_0 = arith.constant 0 : i32
    return %arg0, %c0_i32 : i32, i32
  }
  func.func @transform_1(%arg0: i32) -> (i32, i32) {
    %c0_i32 = arith.constant 0 : i32
    %c0_i32_0 = arith.constant 0 : i32
    %c0_i32_1 = arith.constant 0 : i32
    return %c0_i32, %c0_i32_0 : i32, i32
  }
  func.func @transform_2(%arg0: i32) -> (i32, i32) {
    %c0_i32 = arith.constant 0 : i32
    %c0_i32_0 = arith.constant 0 : i32
    %c0_i32_1 = arith.constant 0 : i32
    return %c0_i32, %c0_i32_0 : i32, i32
  }
  func.func @transform_3(%arg0: i32) -> (i32, i32) {
    %c0_i32 = arith.constant 0 : i32
    %c0_i32_0 = arith.constant 0 : i32
    %c0_i32_1 = arith.constant 0 : i32
    return %c0_i32, %c0_i32_0 : i32, i32
  }
  func.func @transform_4(%arg0: i32) -> (i32, i32) {
    %c0_i32 = arith.constant 0 : i32
    %c0_i32_0 = arith.constant 0 : i32
    return %arg0, %c0_i32 : i32, i32
  }
}

module attributes {stable_mosaic.version = 11 : i64} {
  func.func @_projection_head_kernel(%arg0: i32, %arg1: memref<8x64xf32, #tpu.memory_space<vmem>>, %arg2: memref<64x128xbf16, #tpu.memory_space<vmem>>, %arg3: memref<128x128xbf16, #tpu.memory_space<vmem>>, %arg4: memref<4x128xf32, #tpu.memory_space<vmem>>, %arg5: memref<8x128xbf16, #tpu.memory_space<vmem>>) attributes {dimension_semantics = [#tpu.dimension_semantics<parallel>], iteration_bounds = array<i64: 1>, scalar_prefetch = 0 : i64, scratch_operands = 0 : i64, tpu.core_type = #tpu.core_type<tc>, window_params = [{transform_indices = @transform_0, window_bounds = array<i64: 8, 64>}, {pipeline_mode = #tpu.pipeline_mode<synchronous>, transform_indices = @transform_1, window_bounds = array<i64: 64, 128>}, {pipeline_mode = #tpu.pipeline_mode<synchronous>, transform_indices = @transform_2, window_bounds = array<i64: 128, 128>}, {pipeline_mode = #tpu.pipeline_mode<synchronous>, transform_indices = @transform_3, window_bounds = array<i64: 4, 128>}, {transform_indices = @transform_4, window_bounds = array<i64: 8, 128>}]} {
    %c0 = arith.constant 0 : index
    %c0_0 = arith.constant 0 : index
    %0 = vector.load %arg1[%c0, %c0_0] : memref<8x64xf32, #tpu.memory_space<vmem>>, vector<8x64xf32>
    %1 = arith.truncf %0 : vector<8x64xf32> to vector<8x64xbf16>
    %c0_1 = arith.constant 0 : index
    %c0_2 = arith.constant 0 : index
    %2 = vector.load %arg2[%c0_1, %c0_2] : memref<64x128xbf16, #tpu.memory_space<vmem>>, vector<64x128xbf16>
    %cst = arith.constant dense<0.000000e+00> : vector<8x128xf32>
    %3 = tpu.matmul %1, %2, %cst {dimension_numbers = #tpu.dot_dimension_numbers<[1], [0], [0], [1], [0, 0, 1, 1], [], []>} : vector<8x64xbf16>, vector<64x128xbf16>, vector<8x128xf32> -> vector<8x128xf32>
    %c0_3 = arith.constant 0 : index
    %c0_4 = arith.constant 0 : index
    %4 = vector.load %arg4[%c0_3, %c0_4] : memref<4x128xf32, #tpu.memory_space<vmem>>, vector<4x128xf32>
    %5 = vector.extract_strided_slice %4 {offsets = [0, 0], sizes = [1, 128], strides = [1, 1]} : vector<4x128xf32> to vector<1x128xf32>
    %6 = vector.shape_cast %5 : vector<1x128xf32> to vector<128xf32>
    %7 = vector.shape_cast %6 : vector<128xf32> to vector<1x128xf32>
    %8 = vector.broadcast %7 : vector<1x128xf32> to vector<8x128xf32>
    %9 = arith.addf %3, %8 : vector<8x128xf32>
    %cst_5 = arith.constant 5.000000e-01 : f32
    %10 = vector.broadcast %cst_5 : f32 to vector<8x128xf32>
    %11 = arith.mulf %10, %9 : vector<8x128xf32>
    %cst_6 = arith.constant 0.707106769 : f32
    %12 = vector.broadcast %cst_6 : f32 to vector<8x128xf32>
    %13 = arith.mulf %9, %12 : vector<8x128xf32>
    %14 = math.erf %13 : vector<8x128xf32>
    %cst_7 = arith.constant 1.000000e+00 : f32
    %15 = vector.broadcast %cst_7 : f32 to vector<8x128xf32>
    %16 = arith.addf %15, %14 : vector<8x128xf32>
    %17 = arith.mulf %11, %16 : vector<8x128xf32>
    %18 = arith.truncf %17 : vector<8x128xf32> to vector<8x128xbf16>
    %c0_8 = arith.constant 0 : index
    %c0_9 = arith.constant 0 : index
    %19 = vector.load %arg3[%c0_8, %c0_9] : memref<128x128xbf16, #tpu.memory_space<vmem>>, vector<128x128xbf16>
    %cst_10 = arith.constant dense<0.000000e+00> : vector<8x128xf32>
    %20 = tpu.matmul %18, %19, %cst_10 {dimension_numbers = #tpu.dot_dimension_numbers<[1], [0], [0], [1], [0, 0, 1, 1], [], []>} : vector<8x128xbf16>, vector<128x128xbf16>, vector<8x128xf32> -> vector<8x128xf32>
    %21 = vector.extract_strided_slice %4 {offsets = [1, 0], sizes = [1, 128], strides = [1, 1]} : vector<4x128xf32> to vector<1x128xf32>
    %22 = vector.shape_cast %21 : vector<1x128xf32> to vector<128xf32>
    %23 = vector.shape_cast %22 : vector<128xf32> to vector<1x128xf32>
    %24 = vector.broadcast %23 : vector<1x128xf32> to vector<8x128xf32>
    %25 = arith.addf %20, %24 : vector<8x128xf32>
    %26 = arith.addf %25, %9 : vector<8x128xf32>
    %cst_11 = arith.constant dense<0.000000e+00> : vector<8xf32>
    %27 = vector.multi_reduction <add>, %26, %cst_11 [1] : vector<8x128xf32> to vector<8xf32>
    %28 = vector.shape_cast %27 : vector<8xf32> to vector<8x1xf32>
    %cst_12 = arith.constant 1.280000e+02 : f32
    %29 = vector.broadcast %cst_12 : f32 to vector<8x1xf32>
    %30 = arith.divf %28, %29 : vector<8x1xf32>
    %31 = vector.broadcast %30 : vector<8x1xf32> to vector<8x128xf32>
    %32 = arith.subf %26, %31 : vector<8x128xf32>
    %33 = arith.mulf %32, %32 : vector<8x128xf32>
    %cst_13 = arith.constant dense<0.000000e+00> : vector<8xf32>
    %34 = vector.multi_reduction <add>, %33, %cst_13 [1] : vector<8x128xf32> to vector<8xf32>
    %35 = vector.shape_cast %34 : vector<8xf32> to vector<8x1xf32>
    %cst_14 = arith.constant 1.280000e+02 : f32
    %36 = vector.broadcast %cst_14 : f32 to vector<8x1xf32>
    %37 = arith.divf %35, %36 : vector<8x1xf32>
    %cst_15 = arith.constant 9.99999996E-13 : f32
    %38 = vector.broadcast %cst_15 : f32 to vector<8x1xf32>
    %39 = arith.addf %37, %38 : vector<8x1xf32>
    %40 = math.rsqrt %39 : vector<8x1xf32>
    %41 = vector.broadcast %40 : vector<8x1xf32> to vector<8x128xf32>
    %42 = arith.mulf %32, %41 : vector<8x128xf32>
    %43 = vector.extract_strided_slice %4 {offsets = [2, 0], sizes = [1, 128], strides = [1, 1]} : vector<4x128xf32> to vector<1x128xf32>
    %44 = vector.shape_cast %43 : vector<1x128xf32> to vector<128xf32>
    %45 = vector.shape_cast %44 : vector<128xf32> to vector<1x128xf32>
    %46 = vector.broadcast %45 : vector<1x128xf32> to vector<8x128xf32>
    %47 = arith.mulf %46, %42 : vector<8x128xf32>
    %48 = vector.extract_strided_slice %4 {offsets = [3, 0], sizes = [1, 128], strides = [1, 1]} : vector<4x128xf32> to vector<1x128xf32>
    %49 = vector.shape_cast %48 : vector<1x128xf32> to vector<128xf32>
    %50 = vector.shape_cast %49 : vector<128xf32> to vector<1x128xf32>
    %51 = vector.broadcast %50 : vector<1x128xf32> to vector<8x128xf32>
    %52 = arith.addf %47, %51 : vector<8x128xf32>
    %53 = arith.truncf %52 : vector<8x128xf32> to vector<8x128xbf16>
    %c0_16 = arith.constant 0 : index
    %c0_17 = arith.constant 0 : index
    %54 = vector.load %arg5[%c0_16, %c0_17] : memref<8x128xbf16, #tpu.memory_space<vmem>>, vector<8x128xbf16>
    tpu.vector_store %arg5[%c0_16, %c0_17], %53 {strides = array<i32>} : memref<8x128xbf16, #tpu.memory_space<vmem>>, vector<8x128xbf16>,
    return
  }
  func.func @transform_0(%arg0: i32) -> (i32, i32) {
    %c0_i32 = arith.constant 0 : i32
    %c0_i32_0 = arith.constant 0 : i32
    return %arg0, %c0_i32 : i32, i32
  }
  func.func @transform_1(%arg0: i32) -> (i32, i32) {
    %c0_i32 = arith.constant 0 : i32
    %c0_i32_0 = arith.constant 0 : i32
    %c0_i32_1 = arith.constant 0 : i32
    return %c0_i32, %c0_i32_0 : i32, i32
  }
  func.func @transform_2(%arg0: i32) -> (i32, i32) {
    %c0_i32 = arith.constant 0 : i32
    %c0_i32_0 = arith.constant 0 : i32
    %c0_i32_1 = arith.constant 0 : i32
    return %c0_i32, %c0_i32_0 : i32, i32
  }
  func.func @transform_3(%arg0: i32) -> (i32, i32) {
    %c0_i32 = arith.constant 0 : i32
    %c0_i32_0 = arith.constant 0 : i32
    %c0_i32_1 = arith.constant 0 : i32
    return %c0_i32, %c0_i32_0 : i32, i32
  }
  func.func @transform_4(%arg0: i32) -> (i32, i32) {
    %c0_i32 = arith.constant 0 : i32
    %c0_i32_0 = arith.constant 0 : i32
    return %arg0, %c0_i32 : i32, i32
  }
}

</mosaic_0001>

<llo_original>
// kernel: tpu_custom_call.1
$region0: #{tpu_custom_call.1}
  #allocation0 [shape = 'u32[]', space=smem, size = 0x4, offset = 0x4, fixed_abs, tag = 'smem constant byte address 0x4 - core index']
  #allocation1 [shape = 'u32[144,128]{1,0:T(1,128)}', space=vmem, size = 0x12000, scoped, tag = 'internal scratch']
  %s0 = inlined_call_operand.hbm [shape: f32[8,64], index: 0, kind: input, shape index: {}]
  %s1 = inlined_call_operand.hbm [shape: bf16[64,128], index: 1, kind: input, shape index: {}]
  %s2 = inlined_call_operand.hbm [shape: bf16[128,128], index: 2, kind: input, shape index: {}]
  %s3 = inlined_call_operand.vmem [shape: f32[4,128], index: 3, kind: input, shape index: {}]
  %s4 = inlined_call_operand.hbm [shape: bf16[8,128], index: 4, kind: output, shape index: {}]
  %s5 = sld [smem:[#allocation0]]
  $region38: #{tpu_custom_call.1} parent=0
    _
  %s7 = ssub.s32 1, %s5
  %s8 = scalar_select 0, %s7, %s5
  $region1: #{tpu_custom_call.1} parent=0
    #allocation2 [shape = 'u8[4096]{0}', space=vmem, size = 0x1000, scoped, tag = 'input window, operand 0, single buffered']
    #allocation3 [shape = 's32[1]{0}', space=sflag, size = 0x4, scoped, tag = 'scoped memory for tpu_custom_call.1']
    #allocation4 [shape = 's32[1]{0}', space=sflag, size = 0x4, scoped, tag = 'scoped memory for tpu_custom_call.1']
    #allocation5 [shape = 'u8[16384]{0}', space=vmem, size = 0x4000, scoped, tag = 'input window, operand 1, single buffered']
    #allocation6 [shape = 's32[1]{0}', space=sflag, size = 0x4, scoped, tag = 'scoped memory for tpu_custom_call.1']
    #allocation7 [shape = 'u8[32768]{0}', space=vmem, size = 0x8000, scoped, tag = 'input window, operand 2, single buffered']
    #allocation8 [shape = 'u8[2048]{0}', space=vmem, size = 0x800, scoped, tag = 'output window, operand 0, single buffered']
    %9 = vsyncpa [#allocation3], 0
    %10 = vsyncpa [#allocation6], 0
    %11 = vsyncpa [#allocation4], 0
    // Predicated region
    $region2: #{tpu_custom_call.1} parent=1 // pred_check
      _
    $region3: #{tpu_custom_call.1} parent=1 // pred_check_branch
      %13 = sbr.rel (0) target = $region5
    $region4: #{tpu_custom_call.1} parent=1 // pred_region
      %s15 = ssub.s32 128, 128
      %16 = vsyncadd [#allocation3], %s15
      %s18 = sshll.u32 [#allocation2], 4
      %s19 = int_to_ptr.vmem [resolvable:$true] %s18
      %21 = dma.hbm_to_vmem [thread:$0]  %s0, 128, %s19, [#allocation3]
    $region5: #{tpu_custom_call.1} parent=1 // pred_fallthru
      _
    // Predicated region
    $region6: #{tpu_custom_call.1} parent=1 // pred_check
      _
    $region7: #{tpu_custom_call.1} parent=1 // pred_check_branch
      %23 = sbr.rel (0) target = $region9
    $region8: #{tpu_custom_call.1} parent=1 // pred_region
      %s25 = ssub.s32 512, 512
      %26 = vsyncadd [#allocation6], %s25
      %s27 = sshll.u32 [#allocation5], 4
      %s28 = int_to_ptr.vmem [resolvable:$true] %s27
      %33 = dma.hbm_to_vmem [thread:$0]  %s1, 512, %s28, [#allocation6], 64, 64, 4
    $region9: #{tpu_custom_call.1} parent=1 // pred_fallthru
      _
    // Predicated region
    $region10: #{tpu_custom_call.1} parent=1 // pred_check
      _
    $region11: #{tpu_custom_call.1} parent=1 // pred_check_branch
      %35 = sbr.rel (0) target = $region13
    $region12: #{tpu_custom_call.1} parent=1 // pred_region
      %s37 = ssub.s32 1024, 1024
      %38 = vsyncadd [#allocation6], %s37
      %s39 = sshll.u32 [#allocation7], 4
      %s40 = int_to_ptr.vmem [resolvable:$true] %s39
      %45 = dma.hbm_to_vmem [thread:$0]  %s2, 1024, %s40, [#allocation6], 64, 64, 4
    $region13: #{tpu_custom_call.1} parent=1 // pred_fallthru
      _
    // Predicated region
    $region14: #{tpu_custom_call.1} parent=1 // pred_check
      _
    $region15: #{tpu_custom_call.1} parent=1 // pred_check_branch
      %47 = sbr.rel (0) target = $region17
    $region16: #{tpu_custom_call.1} parent=1 // pred_region
      _
    $region17: #{tpu_custom_call.1} parent=1 // pred_fallthru
      _
    // Predicated region
    $region18: #{tpu_custom_call.1} parent=1 // pred_check
      _
    $region19: #{tpu_custom_call.1} parent=1 // pred_check_branch
      %49 = sbr.rel (0) target = $region21
    $region20: #{tpu_custom_call.1} parent=1 // pred_region
      %50 = dma.done [#allocation3], 128
    $region21: #{tpu_custom_call.1} parent=1 // pred_fallthru
      _
    // Predicated region
    $region22: #{tpu_custom_call.1} parent=1 // pred_check
      _
    $region23: #{tpu_custom_call.1} parent=1 // pred_check_branch
      %52 = sbr.rel (0) target = $region25
    $region24: #{tpu_custom_call.1} parent=1 // pred_region
      %53 = dma.done [#allocation6], 512
    $region25: #{tpu_custom_call.1} parent=1 // pred_fallthru
      _
    // Predicated region
    $region26: #{tpu_custom_call.1} parent=1 // pred_check
      _
    $region27: #{tpu_custom_call.1} parent=1 // pred_check_branch
      %55 = sbr.rel (0) target = $region29
    $region28: #{tpu_custom_call.1} parent=1 // pred_region
      %56 = dma.done [#allocation6], 1024
    $region29: #{tpu_custom_call.1} parent=1 // pred_fallthru
      _
    %v58 = vld [vmem:[#allocation2] sm:$0xff]
    %v59 = vpack.c.bf16 %v58, %v58
    %v60 = vld [vmem:[#allocation5] sm:$0xf]
    %v61 = vld [vmem:[#allocation5 + $0x4] sm:$0xf]
    %v62 = vld [vmem:[#allocation5 + $0x8] sm:$0xf]
    %v63 = vld [vmem:[#allocation5 + $0xc] sm:$0xf]
    %v64 = vld [vmem:[#allocation5 + $0x10] sm:$0xf]
    %v65 = vld [vmem:[#allocation5 + $0x14] sm:$0xf]
    %v66 = vld [vmem:[#allocation5 + $0x18] sm:$0xf]
    %v67 = vld [vmem:[#allocation5 + $0x1c] sm:$0xf]
    %v68 = vld [vmem:[%s3] sm:$0xf]
    %v69 = vlaneseq
    %v70 = vshrl.u32 %v69, 7
    %v71 = vsub.s32 0, %v70
    %v72 = vrot.slane %v68, %v71
    %v81 = vunpack.c.l.b16 %v60
    %v82 = vunpack.c.l.b16 %v61
    %v83 = vunpack.c.l.b16 %v62
    %v84 = vunpack.c.l.b16 %v63
    %v85 = vunpack.c.l.b16 %v64
    %v86 = vunpack.c.l.b16 %v65
    %v87 = vunpack.c.l.b16 %v66
    %v88 = vunpack.c.l.b16 %v67
    %v89 = vpack.c.b16 %v82, %v81
    %v90 = vpack.c.b16 %v84, %v83
    %v91 = vpack.c.b16 %v86, %v85
    %v92 = vpack.c.b16 %v88, %v87
    %vm97 = vcmask 523264
    %v99 = vsel %vm97, %v59, 0
    %101 = vmatprep.subr.bf16.mxu0 0
    %102 = vmatpush1.bf16.msra.mxu0 %v89
    %103 = vmatprep.subr.bf16.mxu0 0
    %104 = vmatpush1.bf16.msra.mxu0 %v90
    %105 = vmatprep.subr.bf16.mxu0 0
    %106 = vmatpush1.bf16.msra.mxu0 %v91
    %107 = vmatprep.subr.bf16.mxu0 0
    %108 = vmatpush1.bf16.msra.mxu0 %v92
    %109 = vmatprep.subr.bf16.mxu0 0
    %110 = vmatpush1.bf16.msra.mxu0 0
    %111 = vmatprep.subr.bf16.mxu0 0
    %112 = vmatpush1.bf16.msra.mxu0 0
    %113 = vmatprep.subr.bf16.mxu0 0
    %114 = vmatpush1.bf16.msra.mxu0 0
    %115 = vmatprep.subr.bf16.mxu0 0
    %116 = vmatpush1.bf16.msra.mxu0 0
    %117 = vmatprep.subr.bf16.mxu0 0
    %118 = vmatpush1.bf16.msra.mxu0 0
    %119 = vmatprep.subr.bf16.mxu0 0
    %120 = vmatpush1.bf16.msra.mxu0 0
    %121 = vmatprep.subr.bf16.mxu0 0
    %122 = vmatpush1.bf16.msra.mxu0 0
    %123 = vmatprep.subr.bf16.mxu0 0
    %124 = vmatpush1.bf16.msra.mxu0 0
    %125 = vmatprep.subr.bf16.mxu0 0
    %126 = vmatpush1.bf16.msra.mxu0 0
    %127 = vmatprep.subr.bf16.mxu0 0
    %128 = vmatpush1.bf16.msra.mxu0 0
    %129 = vmatprep.subr.bf16.mxu0 0
    %130 = vmatpush1.bf16.msra.mxu0 0
    %131 = vmatprep.subr.bf16.mxu0 0
    %132 = vmatpush1.bf16.msra.mxu0 0
    %133 = vmatprep.mubr.bf16.mxu0 0
    %134 = vmatmul.mubr.bf16.gmra.mrb[0].mxu0 %v99
    %v135 = vpop.f32.mrb[0].mxu0
    %v136 = vadd.f32 %v72, %v135
    %v137 = vpop.f32.mrb[0].mxu0
    %v138 = vpop.f32.mrb[0].mxu0
    %v139 = vpop.f32.mrb[0].mxu0
    %140 = vdwg.mxu0
    %v141 = vmul.f32 %v136, 0.5
    %v142 = vmul.f32 %v136, 0.70710677
    %v143 = verf.f32.pop %v142
    %v144 = vadd.f32 %v143, 1.0
    %v145 = vmul.f32 %v141, %v144
    %v146 = vpack.c.bf16 %v145, %v145
    %v147 = vld [vmem:[#allocation7] sm:$0xf]
    %v148 = vld [vmem:[#allocation7 + $0x4] sm:$0xf]
    %v149 = vld [vmem:[#allocation7 + $0x8] sm:$0xf]
    %v150 = vld [vmem:[#allocation7 + $0xc] sm:$0xf]
    %v151 = vld [vmem:[#allocation7 + $0x10] sm:$0xf]
    %v152 = vld [vmem:[#allocation7 + $0x14] sm:$0xf]
    %v153 = vld [vmem:[#allocation7 + $0x18] sm:$0xf]
    %v154 = vld [vmem:[#allocation7 + $0x1c] sm:$0xf]
    %v155 = vld [vmem:[#allocation7 + $0x20] sm:$0xf]
    %v156 = vld [vmem:[#allocation7 + $0x24] sm:$0xf]
    %v157 = vld [vmem:[#allocation7 + $0x28] sm:$0xf]
    %v158 = vld [vmem:[#allocation7 + $0x2c] sm:$0xf]
    %v159 = vld [vmem:[#allocation7 + $0x30] sm:$0xf]
    %v160 = vld [vmem:[#allocation7 + $0x34] sm:$0xf]
    %v161 = vld [vmem:[#allocation7 + $0x38] sm:$0xf]
    %v162 = vld [vmem:[#allocation7 + $0x3c] sm:$0xf]
    %v163 = vlaneseq
    %v164 = vshrl.u32 %v163, 7
    %v165 = vsub.s32 1, %v164
    %v166 = vrot.slane %v68, %v165
    %v183 = vunpack.c.l.b16 %v147
    %v184 = vunpack.c.l.b16 %v148
    %v185 = vunpack.c.l.b16 %v149
    %v186 = vunpack.c.l.b16 %v150
    %v187 = vunpack.c.l.b16 %v151
    %v188 = vunpack.c.l.b16 %v152
    %v189 = vunpack.c.l.b16 %v153
    %v190 = vunpack.c.l.b16 %v154
    %v191 = vunpack.c.l.b16 %v155
    %v192 = vunpack.c.l.b16 %v156
    %v193 = vunpack.c.l.b16 %v157
    %v194 = vunpack.c.l.b16 %v158
    %v195 = vunpack.c.l.b16 %v159
    %v196 = vunpack.c.l.b16 %v160
    %v197 = vunpack.c.l.b16 %v161
    %v198 = vunpack.c.l.b16 %v162
    %v199 = vpack.c.b16 %v184, %v183
    %v200 = vpack.c.b16 %v186, %v185
    %v201 = vpack.c.b16 %v188, %v187
    %v202 = vpack.c.b16 %v190, %v189
    %v203 = vpack.c.b16 %v192, %v191
    %v204 = vpack.c.b16 %v194, %v193
    %v205 = vpack.c.b16 %v196, %v195
    %v206 = vpack.c.b16 %v198, %v197
    %215 = vmatprep.subr.bf16.mxu0 0
    %216 = vmatpush1.bf16.msra.mxu0 %v199
    %217 = vmatprep.subr.bf16.mxu0 0
    %218 = vmatpush1.bf16.msra.mxu0 %v200
    %219 = vmatprep.subr.bf16.mxu0 0
    %220 = vmatpush1.bf16.msra.mxu0 %v201
    %221 = vmatprep.subr.bf16.mxu0 0
    %222 = vmatpush1.bf16.msra.mxu0 %v202
    %223 = vmatprep.subr.bf16.mxu0 0
    %224 = vmatpush1.bf16.msra.mxu0 %v203
    %225 = vmatprep.subr.bf16.mxu0 0
    %226 = vmatpush1.bf16.msra.mxu0 %v204
    %227 = vmatprep.subr.bf16.mxu0 0
    %228 = vmatpush1.bf16.msra.mxu0 %v205
    %229 = vmatprep.subr.bf16.mxu0 0
    %230 = vmatpush1.bf16.msra.mxu0 %v206
    %231 = vmatprep.subr.bf16.mxu0 0
    %232 = vmatpush1.bf16.msra.mxu0 0
    %233 = vmatprep.subr.bf16.mxu0 0
    %234 = vmatpush1.bf16.msra.mxu0 0
    %235 = vmatprep.subr.bf16.mxu0 0
    %236 = vmatpush1.bf16.msra.mxu0 0
    %237 = vmatprep.subr.bf16.mxu0 0
    %238 = vmatpush1.bf16.msra.mxu0 0
    %239 = vmatprep.subr.bf16.mxu0 0
    %240 = vmatpush1.bf16.msra.mxu0 0
    %241 = vmatprep.subr.bf16.mxu0 0
    %242 = vmatpush1.bf16.msra.mxu0 0
    %243 = vmatprep.subr.bf16.mxu0 0
    %244 = vmatpush1.bf16.msra.mxu0 0
    %245 = vmatprep.subr.bf16.mxu0 0
    %246 = vmatpush1.bf16.msra.mxu0 0
    %247 = vmatprep.mubr.bf16.mxu0 0
    %248 = vmatmul.mubr.bf16.gmra.mrb[0].mxu0 %v146
    %v249 = vpop.f32.mrb[0].mxu0
    %v250 = vadd.f32 %v166, %v249
    %v251 = vpop.f32.mrb[0].mxu0
    %v252 = vpop.f32.mrb[0].mxu0
    %v253 = vpop.f32.mrb[0].mxu0
    %254 = vdwg.mxu0
    %v255 = vadd.f32 %v250, %v136
    %256 = vadd.xlane.f32.xlu0 %v255
    %v257 = vpop.xlane.xlu0 %256
    %v258 = vrcp.pop 128.0
    %v259 = vmul.f32 %v257, %v258
    %v260 = vsub.f32 %v255, %v259
    %v261 = vmul.f32 %v260, %v260
    %262 = vadd.xlane.f32.xlu0 %v261
    %v263 = vpop.xlane.xlu0 %262
    %v264 = vmul.f32 %v263, %v258
    %v265 = vadd.f32 %v264, 1e-12
    %v266 = vrsqrt.pop %v265
    %v267 = vmul.f32 %v260, %v266
    %v268 = vlaneseq
    %v269 = vshrl.u32 %v268, 7
    %v270 = vsub.s32 2, %v269
    %v271 = vrot.slane %v68, %v270
    %v272 = vmul.f32 %v271, %v267
    %v273 = vlaneseq
    %v274 = vshrl.u32 %v273, 7
    %v275 = vsub.s32 3, %v274
    %v276 = vrot.slane %v68, %v275
    %v277 = vadd.f32 %v272, %v276
    %v278 = vpack.c.bf16 %v277, %v277
    %279 = vst [vmem:[#allocation8] sm:$0xf] %v278
    // Predicated region
    $region30: #{tpu_custom_call.1} parent=1 // pred_check
      _
    $region31: #{tpu_custom_call.1} parent=1 // pred_check_branch
      %281 = sbr.rel (0) target = $region33
    $region32: #{tpu_custom_call.1} parent=1 // pred_region
      %s283 = ssub.s32 64, 64
      %284 = vsyncadd [#allocation4], %s283
      %s286 = sshll.u32 [#allocation8], 4
      %s287 = int_to_ptr.vmem [resolvable:$true] %s286
      %289 = dma.vmem_to_hbm [thread:$0]  %s287, 64, %s4, [#allocation4]
    $region33: #{tpu_custom_call.1} parent=1 // pred_fallthru
      _
    // Predicated region
    $region34: #{tpu_custom_call.1} parent=1 // pred_check
      _
    $region35: #{tpu_custom_call.1} parent=1 // pred_check_branch
      %291 = sbr.rel (0) target = $region37
    $region36: #{tpu_custom_call.1} parent=1 // pred_region
      %292 = dma.done [#allocation4], 64
    $region37: #{tpu_custom_call.1} parent=1 // pred_fallthru
      _
    %293 = vsyncpa [#allocation3], 1
    %294 = vsyncpa [#allocation6], 1
    %295 = vsyncpa [#allocation4], 1

// kernel: tpu_custom_call.1
$region0: #{tpu_custom_call.1}
  #allocation0 [shape = 'u32[]', space=smem, size = 0x4, offset = 0x4, fixed_abs, tag = 'smem constant byte address 0x4 - core index']
  #allocation1 [shape = 'u32[144,128]{1,0:T(1,128)}', space=vmem, size = 0x12000, scoped, tag = 'internal scratch']
  %s0 = inlined_call_operand.hbm [shape: f32[8,64], index: 0, kind: input, shape index: {}]
  %s1 = inlined_call_operand.hbm [shape: bf16[64,128], index: 1, kind: input, shape index: {}]
  %s2 = inlined_call_operand.hbm [shape: bf16[128,128], index: 2, kind: input, shape index: {}]
  %s3 = inlined_call_operand.vmem [shape: f32[4,128], index: 3, kind: input, shape index: {}]
  %s4 = inlined_call_operand.hbm [shape: bf16[8,128], index: 4, kind: output, shape index: {}]
  %s5 = sld [smem:[#allocation0]]
  $region38: #{tpu_custom_call.1} parent=0
    _
  %s7 = ssub.s32 1, %s5
  %s8 = scalar_select 0, %s7, %s5
  $region1: #{tpu_custom_call.1} parent=0
    #allocation2 [shape = 'u8[4096]{0}', space=vmem, size = 0x1000, scoped, tag = 'input window, operand 0, single buffered']
    #allocation3 [shape = 's32[1]{0}', space=sflag, size = 0x4, scoped, tag = 'scoped memory for tpu_custom_call.1']
    #allocation4 [shape = 's32[1]{0}', space=sflag, size = 0x4, scoped, tag = 'scoped memory for tpu_custom_call.1']
    #allocation5 [shape = 'u8[16384]{0}', space=vmem, size = 0x4000, scoped, tag = 'input window, operand 1, single buffered']
    #allocation6 [shape = 's32[1]{0}', space=sflag, size = 0x4, scoped, tag = 'scoped memory for tpu_custom_call.1']
    #allocation7 [shape = 'u8[32768]{0}', space=vmem, size = 0x8000, scoped, tag = 'input window, operand 2, single buffered']
    #allocation8 [shape = 'u8[2048]{0}', space=vmem, size = 0x800, scoped, tag = 'output window, operand 0, single buffered']
    %9 = vsyncpa [#allocation3], 0
    %10 = vsyncpa [#allocation6], 0
    %11 = vsyncpa [#allocation4], 0
    // Predicated region
    $region2: #{tpu_custom_call.1} parent=1 // pred_check
      _
    $region3: #{tpu_custom_call.1} parent=1 // pred_check_branch
      %13 = sbr.rel (0) target = $region5
    $region4: #{tpu_custom_call.1} parent=1 // pred_region
      %s15 = ssub.s32 128, 128
      %16 = vsyncadd [#allocation3], %s15
      %s18 = sshll.u32 [#allocation2], 4
      %s19 = int_to_ptr.vmem [resolvable:$true] %s18
      %21 = dma.hbm_to_vmem [thread:$0]  %s0, 128, %s19, [#allocation3]
    $region5: #{tpu_custom_call.1} parent=1 // pred_fallthru
      _
    // Predicated region
    $region6: #{tpu_custom_call.1} parent=1 // pred_check
      _
    $region7: #{tpu_custom_call.1} parent=1 // pred_check_branch
      %23 = sbr.rel (0) target = $region9
    $region8: #{tpu_custom_call.1} parent=1 // pred_region
      %s25 = ssub.s32 512, 512
      %26 = vsyncadd [#allocation6], %s25
      %s27 = sshll.u32 [#allocation5], 4
      %s28 = int_to_ptr.vmem [resolvable:$true] %s27
      %33 = dma.hbm_to_vmem [thread:$0]  %s1, 512, %s28, [#allocation6], 64, 64, 4
    $region9: #{tpu_custom_call.1} parent=1 // pred_fallthru
      _
    // Predicated region
    $region10: #{tpu_custom_call.1} parent=1 // pred_check
      _
    $region11: #{tpu_custom_call.1} parent=1 // pred_check_branch
      %35 = sbr.rel (0) target = $region13
    $region12: #{tpu_custom_call.1} parent=1 // pred_region
      %s37 = ssub.s32 1024, 1024
      %38 = vsyncadd [#allocation6], %s37
      %s39 = sshll.u32 [#allocation7], 4
      %s40 = int_to_ptr.vmem [resolvable:$true] %s39
      %45 = dma.hbm_to_vmem [thread:$0]  %s2, 1024, %s40, [#allocation6], 64, 64, 4
    $region13: #{tpu_custom_call.1} parent=1 // pred_fallthru
      _
    // Predicated region
    $region14: #{tpu_custom_call.1} parent=1 // pred_check
      _
    $region15: #{tpu_custom_call.1} parent=1 // pred_check_branch
      %47 = sbr.rel (0) target = $region17
    $region16: #{tpu_custom_call.1} parent=1 // pred_region
      _
    $region17: #{tpu_custom_call.1} parent=1 // pred_fallthru
      _
    // Predicated region
    $region18: #{tpu_custom_call.1} parent=1 // pred_check
      _
    $region19: #{tpu_custom_call.1} parent=1 // pred_check_branch
      %49 = sbr.rel (0) target = $region21
    $region20: #{tpu_custom_call.1} parent=1 // pred_region
      %50 = dma.done [#allocation3], 128
    $region21: #{tpu_custom_call.1} parent=1 // pred_fallthru
      _
    // Predicated region
    $region22: #{tpu_custom_call.1} parent=1 // pred_check
      _
    $region23: #{tpu_custom_call.1} parent=1 // pred_check_branch
      %52 = sbr.rel (0) target = $region25
    $region24: #{tpu_custom_call.1} parent=1 // pred_region
      %53 = dma.done [#allocation6], 512
    $region25: #{tpu_custom_call.1} parent=1 // pred_fallthru
      _
    // Predicated region
    $region26: #{tpu_custom_call.1} parent=1 // pred_check
      _
    $region27: #{tpu_custom_call.1} parent=1 // pred_check_branch
      %55 = sbr.rel (0) target = $region29
    $region28: #{tpu_custom_call.1} parent=1 // pred_region
      %56 = dma.done [#allocation6], 1024
    $region29: #{tpu_custom_call.1} parent=1 // pred_fallthru
      _
    %v58 = vld [vmem:[#allocation2] sm:$0xff]
    %v59 = vpack.c.bf16 %v58, %v58
    %v60 = vld [vmem:[#allocation5] sm:$0xf]
    %v61 = vld [vmem:[#allocation5 + $0x4] sm:$0xf]
    %v62 = vld [vmem:[#allocation5 + $0x8] sm:$0xf]
    %v63 = vld [vmem:[#allocation5 + $0xc] sm:$0xf]
    %v64 = vld [vmem:[#allocation5 + $0x10] sm:$0xf]
    %v65 = vld [vmem:[#allocation5 + $0x14] sm:$0xf]
    %v66 = vld [vmem:[#allocation5 + $0x18] sm:$0xf]
    %v67 = vld [vmem:[#allocation5 + $0x1c] sm:$0xf]
    %v68 = vld [vmem:[%s3] sm:$0xf]
    %v69 = vlaneseq
    %v70 = vshrl.u32 %v69, 7
    %v71 = vsub.s32 0, %v70
    %v72 = vrot.slane %v68, %v71
    %v81 = vunpack.c.l.b16 %v60
    %v82 = vunpack.c.l.b16 %v61
    %v83 = vunpack.c.l.b16 %v62
    %v84 = vunpack.c.l.b16 %v63
    %v85 = vunpack.c.l.b16 %v64
    %v86 = vunpack.c.l.b16 %v65
    %v87 = vunpack.c.l.b16 %v66
    %v88 = vunpack.c.l.b16 %v67
    %v89 = vpack.c.b16 %v82, %v81
    %v90 = vpack.c.b16 %v84, %v83
    %v91 = vpack.c.b16 %v86, %v85
    %v92 = vpack.c.b16 %v88, %v87
    %vm97 = vcmask 523264
    %v99 = vsel %vm97, %v59, 0
    %101 = vmatprep.subr.bf16.mxu0 0
    %102 = vmatpush1.bf16.msra.mxu0 %v89
    %103 = vmatprep.subr.bf16.mxu0 0
    %104 = vmatpush1.bf16.msra.mxu0 %v90
    %105 = vmatprep.subr.bf16.mxu0 0
    %106 = vmatpush1.bf16.msra.mxu0 %v91
    %107 = vmatprep.subr.bf16.mxu0 0
    %108 = vmatpush1.bf16.msra.mxu0 %v92
    %109 = vmatprep.subr.bf16.mxu0 0
    %110 = vmatpush1.bf16.msra.mxu0 0
    %111 = vmatprep.subr.bf16.mxu0 0
    %112 = vmatpush1.bf16.msra.mxu0 0
    %113 = vmatprep.subr.bf16.mxu0 0
    %114 = vmatpush1.bf16.msra.mxu0 0
    %115 = vmatprep.subr.bf16.mxu0 0
    %116 = vmatpush1.bf16.msra.mxu0 0
    %117 = vmatprep.subr.bf16.mxu0 0
    %118 = vmatpush1.bf16.msra.mxu0 0
    %119 = vmatprep.subr.bf16.mxu0 0
    %120 = vmatpush1.bf16.msra.mxu0 0
    %121 = vmatprep.subr.bf16.mxu0 0
    %122 = vmatpush1.bf16.msra.mxu0 0
    %123 = vmatprep.subr.bf16.mxu0 0
    %124 = vmatpush1.bf16.msra.mxu0 0
    %125 = vmatprep.subr.bf16.mxu0 0
    %126 = vmatpush1.bf16.msra.mxu0 0
    %127 = vmatprep.subr.bf16.mxu0 0
    %128 = vmatpush1.bf16.msra.mxu0 0
    %129 = vmatprep.subr.bf16.mxu0 0
    %130 = vmatpush1.bf16.msra.mxu0 0
    %131 = vmatprep.subr.bf16.mxu0 0
    %132 = vmatpush1.bf16.msra.mxu0 0
    %133 = vmatprep.mubr.bf16.mxu0 0
    %134 = vmatmul.mubr.bf16.gmra.mrb[0].mxu0 %v99
    %v135 = vpop.f32.mrb[0].mxu0
    %v136 = vadd.f32 %v72, %v135
    %v137 = vpop.f32.mrb[0].mxu0
    %v138 = vpop.f32.mrb[0].mxu0
    %v139 = vpop.f32.mrb[0].mxu0
    %140 = vdwg.mxu0
    %v141 = vmul.f32 %v136, 0.5
    %v142 = vmul.f32 %v136, 0.70710677
    %v143 = verf.f32.pop %v142
    %v144 = vadd.f32 %v143, 1.0
    %v145 = vmul.f32 %v141, %v144
    %v146 = vpack.c.bf16 %v145, %v145
    %v147 = vld [vmem:[#allocation7] sm:$0xf]
    %v148 = vld [vmem:[#allocation7 + $0x4] sm:$0xf]
    %v149 = vld [vmem:[#allocation7 + $0x8] sm:$0xf]
    %v150 = vld [vmem:[#allocation7 + $0xc] sm:$0xf]
    %v151 = vld [vmem:[#allocation7 + $0x10] sm:$0xf]
    %v152 = vld [vmem:[#allocation7 + $0x14] sm:$0xf]
    %v153 = vld [vmem:[#allocation7 + $0x18] sm:$0xf]
    %v154 = vld [vmem:[#allocation7 + $0x1c] sm:$0xf]
    %v155 = vld [vmem:[#allocation7 + $0x20] sm:$0xf]
    %v156 = vld [vmem:[#allocation7 + $0x24] sm:$0xf]
    %v157 = vld [vmem:[#allocation7 + $0x28] sm:$0xf]
    %v158 = vld [vmem:[#allocation7 + $0x2c] sm:$0xf]
    %v159 = vld [vmem:[#allocation7 + $0x30] sm:$0xf]
    %v160 = vld [vmem:[#allocation7 + $0x34] sm:$0xf]
    %v161 = vld [vmem:[#allocation7 + $0x38] sm:$0xf]
    %v162 = vld [vmem:[#allocation7 + $0x3c] sm:$0xf]
    %v163 = vlaneseq
    %v164 = vshrl.u32 %v163, 7
    %v165 = vsub.s32 1, %v164
    %v166 = vrot.slane %v68, %v165
    %v183 = vunpack.c.l.b16 %v147
    %v184 = vunpack.c.l.b16 %v148
    %v185 = vunpack.c.l.b16 %v149
    %v186 = vunpack.c.l.b16 %v150
    %v187 = vunpack.c.l.b16 %v151
    %v188 = vunpack.c.l.b16 %v152
    %v189 = vunpack.c.l.b16 %v153
    %v190 = vunpack.c.l.b16 %v154
    %v191 = vunpack.c.l.b16 %v155
    %v192 = vunpack.c.l.b16 %v156
    %v193 = vunpack.c.l.b16 %v157
    %v194 = vunpack.c.l.b16 %v158
    %v195 = vunpack.c.l.b16 %v159
    %v196 = vunpack.c.l.b16 %v160
    %v197 = vunpack.c.l.b16 %v161
    %v198 = vunpack.c.l.b16 %v162
    %v199 = vpack.c.b16 %v184, %v183
    %v200 = vpack.c.b16 %v186, %v185
    %v201 = vpack.c.b16 %v188, %v187
    %v202 = vpack.c.b16 %v190, %v189
    %v203 = vpack.c.b16 %v192, %v191
    %v204 = vpack.c.b16 %v194, %v193
    %v205 = vpack.c.b16 %v196, %v195
    %v206 = vpack.c.b16 %v198, %v197
    %215 = vmatprep.subr.bf16.mxu0 0
    %216 = vmatpush1.bf16.msra.mxu0 %v199
    %217 = vmatprep.subr.bf16.mxu0 0
    %218 = vmatpush1.bf16.msra.mxu0 %v200
    %219 = vmatprep.subr.bf16.mxu0 0
    %220 = vmatpush1.bf16.msra.mxu0 %v201
    %221 = vmatprep.subr.bf16.mxu0 0
    %222 = vmatpush1.bf16.msra.mxu0 %v202
    %223 = vmatprep.subr.bf16.mxu0 0
    %224 = vmatpush1.bf16.msra.mxu0 %v203
    %225 = vmatprep.subr.bf16.mxu0 0
    %226 = vmatpush1.bf16.msra.mxu0 %v204
    %227 = vmatprep.subr.bf16.mxu0 0
    %228 = vmatpush1.bf16.msra.mxu0 %v205
    %229 = vmatprep.subr.bf16.mxu0 0
    %230 = vmatpush1.bf16.msra.mxu0 %v206
    %231 = vmatprep.subr.bf16.mxu0 0
    %232 = vmatpush1.bf16.msra.mxu0 0
    %233 = vmatprep.subr.bf16.mxu0 0
    %234 = vmatpush1.bf16.msra.mxu0 0
    %235 = vmatprep.subr.bf16.mxu0 0
    %236 = vmatpush1.bf16.msra.mxu0 0
    %237 = vmatprep.subr.bf16.mxu0 0
    %238 = vmatpush1.bf16.msra.mxu0 0
    %239 = vmatprep.subr.bf16.mxu0 0
    %240 = vmatpush1.bf16.msra.mxu0 0
    %241 = vmatprep.subr.bf16.mxu0 0
    %242 = vmatpush1.bf16.msra.mxu0 0
    %243 = vmatprep.subr.bf16.mxu0 0
    %244 = vmatpush1.bf16.msra.mxu0 0
    %245 = vmatprep.subr.bf16.mxu0 0
    %246 = vmatpush1.bf16.msra.mxu0 0
    %247 = vmatprep.mubr.bf16.mxu0 0
    %248 = vmatmul.mubr.bf16.gmra.mrb[0].mxu0 %v146
    %v249 = vpop.f32.mrb[0].mxu0
    %v250 = vadd.f32 %v166, %v249
    %v251 = vpop.f32.mrb[0].mxu0
    %v252 = vpop.f32.mrb[0].mxu0
    %v253 = vpop.f32.mrb[0].mxu0
    %254 = vdwg.mxu0
    %v255 = vadd.f32 %v250, %v136
    %256 = vadd.xlane.f32.xlu0 %v255
    %v257 = vpop.xlane.xlu0 %256
    %v258 = vrcp.pop 128.0
    %v259 = vmul.f32 %v257, %v258
    %v260 = vsub.f32 %v255, %v259
    %v261 = vmul.f32 %v260, %v260
    %262 = vadd.xlane.f32.xlu0 %v261
    %v263 = vpop.xlane.xlu0 %262
    %v264 = vmul.f32 %v263, %v258
    %v265 = vadd.f32 %v264, 1e-12
    %v266 = vrsqrt.pop %v265
    %v267 = vmul.f32 %v260, %v266
    %v268 = vlaneseq
    %v269 = vshrl.u32 %v268, 7
    %v270 = vsub.s32 2, %v269
    %v271 = vrot.slane %v68, %v270
    %v272 = vmul.f32 %v271, %v267
    %v273 = vlaneseq
    %v274 = vshrl.u32 %v273, 7
    %v275 = vsub.s32 3, %v274
    %v276 = vrot.slane %v68, %v275
    %v277 = vadd.f32 %v272, %v276
    %v278 = vpack.c.bf16 %v277, %v277
    %279 = vst [vmem:[#allocation8] sm:$0xf] %v278
    // Predicated region
    $region30: #{tpu_custom_call.1} parent=1 // pred_check
      _
    $region31: #{tpu_custom_call.1} parent=1 // pred_check_branch
      %281 = sbr.rel (0) target = $region33
    $region32: #{tpu_custom_call.1} parent=1 // pred_region
      %s283 = ssub.s32 64, 64
      %284 = vsyncadd [#allocation4], %s283
      %s286 = sshll.u32 [#allocation8], 4
      %s287 = int_to_ptr.vmem [resolvable:$true] %s286
      %289 = dma.vmem_to_hbm [thread:$0]  %s287, 64, %s4, [#allocation4]
    $region33: #{tpu_custom_call.1} parent=1 // pred_fallthru
      _
    // Predicated region
    $region34: #{tpu_custom_call.1} parent=1 // pred_check
      _
    $region35: #{tpu_custom_call.1} parent=1 // pred_check_branch
      %291 = sbr.rel (0) target = $region37
    $region36: #{tpu_custom_call.1} parent=1 // pred_region
      %292 = dma.done [#allocation4], 64
    $region37: #{tpu_custom_call.1} parent=1 // pred_fallthru
      _
    %293 = vsyncpa [#allocation3], 1
    %294 = vsyncpa [#allocation6], 1
    %295 = vsyncpa [#allocation4], 1

</llo_original>
